<compile_context>
chip_gen: v7x
topology: tpu7x:2x2x1
jax: 0.10.0
libtpu: 0.0.40
codegen_flags: <defaults>
</compile_context>

<pallas_src>
import functools

import jax
import jax.numpy as jnp
from jax.experimental import pallas as pl
from jax.experimental.pallas import tpu as pltpu


# ----------------------------------------------------------------------------
# Helpers
# ----------------------------------------------------------------------------
def _round_up(n, m):
    return ((n + m - 1) // m) * m


def _pad2d(a, rows, cols):
    pr, pc = rows - a.shape[0], cols - a.shape[1]
    if pr == 0 and pc == 0:
        return a
    return jnp.pad(a, ((0, pr), (0, pc)))


def _vmem_capacity_bytes():
    """Physical per-core VMEM; conservative (v7x-sized) fallback if unknown."""
    try:
        cap = int(pltpu.get_tpu_info().vmem_capacity_bytes)
        if cap > 0:
            return cap
    except Exception:
        pass
    return 64 * 1024 * 1024


def _pick_tile(padded, candidates=(1024, 512, 256, 128)):
    for c in candidates:
        if c <= padded and padded % c == 0:
            return c
    return 128


def _shrink_to_fit(cost_fn, tk, td, budget):
    # Keep both MXU-facing dims at >= 256 (v6e/v7x MXU is 256x256) before
    # dropping either one down to 128.
    for floor in (256, 128):
        while cost_fn(tk, td) > budget and tk > floor:
            tk //= 2
        while cost_fn(tk, td) > budget and td > floor:
            td //= 2
    return tk, td


# ----------------------------------------------------------------------------
# Path A: batch-resident fused kernel (grid = (Dout tiles, K tiles))
# ----------------------------------------------------------------------------
def _fused_dense_bn_relu_kernel(x_ref, w_ref, gb_ref, o_ref, *,
                                eps, inv_n, tk, x_resident):
    k = pl.program_id(1)
    nk = pl.num_programs(1)

    if x_resident:
        # x is fully VMEM-resident (fetched once); slice the current K chunk.
        start = pl.multiple_of(k * tk, tk)
        xm = x_ref[:, pl.ds(start, tk)]
    else:
        xm = x_ref[...]

    partial = jnp.dot(xm, w_ref[...], preferred_element_type=jnp.float32)

    # Accumulate directly into the resident f32 output block (no scratch).
    @pl.when(k == 0)
    def _():
        o_ref[...] = partial

    @pl.when(k != 0)
    def _():
        o_ref[...] += partial

    # BN + affine + ReLU epilogue only on the last K step.
    @pl.when(k == nk - 1)
    def _():
        y = o_ref[...]
        # Single-pass statistics.  Padded batch rows of x are all-zero (the
        # Linear bias is folded away), so they contribute nothing to either
        # sum; divide by the true batch size.
        s = jnp.sum(y, axis=0, keepdims=True)
        ss = jnp.sum(y * y, axis=0, keepdims=True)
        mean = s * inv_n
        var = jnp.maximum(ss * inv_n - mean * mean, 0.0)
        gb = gb_ref[...]                      # (2, TD): row 0 gamma, row 1 beta
        scale = gb[0:1, :] * jax.lax.rsqrt(var + eps)
        shift = gb[1:2, :] - mean * scale
        o_ref[...] = jnp.maximum(y * scale + shift, 0.0).astype(o_ref.dtype)


# ----------------------------------------------------------------------------
# Path B1: batch-tiled matmul + per-feature partial sums
#          (grid = (Dout tiles, M tiles, K tiles))
# ----------------------------------------------------------------------------
def _matmul_partial_stats_kernel(x_ref, w_ref, y_ref, stat_ref):
    m = pl.program_id(1)
    k = pl.program_id(2)
    nk = pl.num_programs(2)

    partial = jnp.dot(x_ref[...], w_ref[...], preferred_element_type=jnp.float32)

    @pl.when(k == 0)
    def _():
        y_ref[...] = partial

    @pl.when(k != 0)
    def _():
        y_ref[...] += partial

    # stat_ref block index depends only on the Dout tile -> resident across
    # the (arbitrary) M and K axes: zero it on the first step of each D tile.
    @pl.when(jnp.logical_and(m == 0, k == 0))
    def _():
        stat_ref[...] = jnp.zeros_like(stat_ref)

    @pl.when(k == nk - 1)
    def _():
        y = y_ref[...]
        s = jnp.sum(y, axis=0, keepdims=True)
        ss = jnp.sum(y * y, axis=0, keepdims=True)
        stat_ref[...] = stat_ref[...] + jnp.concatenate([s, ss], axis=0)


# ----------------------------------------------------------------------------
# Path B2: normalize + affine + ReLU (grid = (M tiles, Dout tiles))
# ----------------------------------------------------------------------------
def _bn_relu_kernel(y_ref, stat_ref, gb_ref, o_ref, *, eps, inv_n):
    st = stat_ref[...]
    mean = st[0:1, :] * inv_n
    var = jnp.maximum(st[1:2, :] * inv_n - mean * mean, 0.0)
    gb = gb_ref[...]
    scale = gb[0:1, :] * jax.lax.rsqrt(var + eps)
    shift = gb[1:2, :] - mean * scale
    o_ref[...] = jnp.maximum(y_ref[...] * scale + shift, 0.0).astype(o_ref.dtype)


# ----------------------------------------------------------------------------
# Wrapper
# ----------------------------------------------------------------------------
def dense_forward(x, w, b=None, gamma=None, beta=None, *, eps=1e-5,
                  mxu_dtype=None, force_batch_tiled=False):
    """Forward of `dense` (defaults): Linear -> BatchNorm1d (train stats) -> ReLU.

    x:     (N, in_features) float32
    w:     (in_features, out_features) float32 (Linear weight, pre-transposed)
    b:     Linear bias — accepted for interface parity but unused: a
           per-feature constant added before training-mode BatchNorm cancels
           exactly ((y+b) - mean(y+b) == y - mean(y); variance unchanged).
    gamma/beta: BatchNorm affine params, (out_features,) or (1, out_features).
    mxu_dtype:  set to jnp.bfloat16 on v6e/v7x for full-rate MXU matmul and
           half the input DMA (f32 accumulation kept; small accuracy change).
    """
    del b  # cancels exactly under training-mode BatchNorm (see docstring)

    N, Din = x.shape
    Dout = w.shape[1]
    gamma = jnp.reshape(gamma, (1, Dout)).astype(jnp.float32)
    beta = jnp.reshape(beta, (1, Dout)).astype(jnp.float32)

    out_dtype = jnp.float32  # keep f32: required for in-place o_ref accumulation
    in_dtype = mxu_dtype if mxu_dtype is not None else x.dtype
    in_bytes = jnp.dtype(in_dtype).itemsize

    Kpad = _round_up(Din, 128)
    Dpad = _round_up(Dout, 128)

    # Generation-aware VMEM budgeting (v5e/v6e: 128 MiB; v7x: 64 MiB).
    vmem_cap = _vmem_capacity_bytes()
    small_vmem = vmem_cap <= 64 * 1024 * 1024             # v7x-like (2 TC, 64 MiB)
    budget = min(int(vmem_cap * 0.75), vmem_cap - 16 * 1024 * 1024)
    vmem_limit = min(int(vmem_cap * 0.875), vmem_cap - 8 * 1024 * 1024)

    # Packed / padded parameters (in a real model: prepare once at init).
    gbp = _pad2d(jnp.concatenate([gamma, beta], axis=0), 2, Dpad)
    wp = _pad2d(w, Kpad, Dpad).astype(in_dtype)

    def compiler(sem):
        return pltpu.CompilerParams(dimension_semantics=sem,
                                    vmem_limit_bytes=vmem_limit)

    # ------------------------------------------------------------------
    # Path A: batch axis resident in VMEM (fused single kernel).
    # ------------------------------------------------------------------
    Npad_a = _round_up(N, 8)

    def bytes_a(tk, td, x_cols=None):
        x_cols = tk if x_cols is None else x_cols
        return (2 * Npad_a * x_cols * in_bytes       # x tile, double-buffered
                + 2 * tk * td * in_bytes             # W tile, double-buffered
                + 2 * 8 * td * 4                     # (2, td) params -> 8 sublanes
                + 2 * Npad_a * td * 4)               # resident f32 output block

    # Only keep the batch resident if decent (>=256 where possible) tiles fit;
    # otherwise the batch-tiled path is the better trade.
    use_fused = (not force_batch_tiled and
                 bytes_a(min(Kpad, 256), min(Dpad, 256)) <= budget)

    if use_fused:
        xp = _pad2d(x, Npad_a, Kpad).astype(in_dtype)

        TD = _pick_tile(Dpad)
        TK = _pick_tile(Kpad)
        TK, TD = _shrink_to_fit(bytes_a, TK, TD, budget)
        # v7x (2 TensorCores): make sure the "parallel" Dout axis has >=2 tiles.
        while small_vmem and Dpad >= 256 and Dpad // TD < 2 and TD > 128:
            TD //= 2

        nd, nk = Dpad // TD, Kpad // TK
        # If the whole x fits in VMEM, fetch it once instead of re-streaming
        # every K tile for every Dout tile.
        x_resident = (nk > 1 and nd > 1 and
                      bytes_a(TK, TD, x_cols=Kpad) <= budget)
        x_spec = (pl.BlockSpec((Npad_a, Kpad), lambda j, k: (0, 0))
                  if x_resident else
                  pl.BlockSpec((Npad_a, TK), lambda j, k: (0, k)))

        kern = functools.partial(_fused_dense_bn_relu_kernel, eps=float(eps),
                                 inv_n=1.0 / float(N), tk=TK,
                                 x_resident=x_resident)

        out = pl.pallas_call(
            kern,
            out_shape=jax.ShapeDtypeStruct((Npad_a, Dpad), out_dtype),
            grid_spec=pltpu.PrefetchScalarGridSpec(
                num_scalar_prefetch=0,
                grid=(nd, nk),
                in_specs=[
                    x_spec,                                          # x
                    pl.BlockSpec((TK, TD), lambda j, k: (k, j)),     # W
                    pl.BlockSpec((2, TD), lambda j, k: (0, j)),      # gamma/beta
                ],
                out_specs=pl.BlockSpec((Npad_a, TD), lambda j, k: (0, j)),
            ),
            compiler_params=compiler(("parallel", "arbitrary")),
        )(xp, wp, gbp)
        return out[:N, :Dout]

    # ------------------------------------------------------------------
    # Path B: batch-tiled (VMEM footprint independent of N).
    # ------------------------------------------------------------------
    TM = min(512, _round_up(N, 128))
    TD = _pick_tile(Dpad)
    TK = _pick_tile(Kpad)

    def bytes_b(tk, td):
        return (2 * TM * tk * in_bytes
                + 2 * tk * td * in_bytes
                + 2 * 8 * td * 4
                + 2 * TM * td * 4)

    TK, TD = _shrink_to_fit(bytes_b, TK, TD, budget)
    while bytes_b(TK, TD) > budget and TM > 128:
        TM //= 2
    while small_vmem and Dpad >= 256 and Dpad // TD < 2 and TD > 128:
        TD //= 2

    Npad_b = _round_up(N, TM)
    xp = _pad2d(x, Npad_b, Kpad).astype(in_dtype)
    nd, nm, nk = Dpad // TD, Npad_b // TM, Kpad // TK

    # B1: tiled matmul -> pre-BN activations + per-feature partial sums.
    y, stats = pl.pallas_call(
        _matmul_partial_stats_kernel,
        out_shape=(jax.ShapeDtypeStruct((Npad_b, Dpad), jnp.float32),
                   jax.ShapeDtypeStruct((2, Dpad), jnp.float32)),
        grid_spec=pltpu.PrefetchScalarGridSpec(
            num_scalar_prefetch=0,
            grid=(nd, nm, nk),
            in_specs=[
                pl.BlockSpec((TM, TK), lambda d, m, k: (m, k)),      # x
                pl.BlockSpec((TK, TD), lambda d, m, k: (k, d)),      # W
            ],
            out_specs=[
                pl.BlockSpec((TM, TD), lambda d, m, k: (m, d)),      # y
                pl.BlockSpec((2, TD), lambda d, m, k: (0, d)),       # partial sums
            ],
        ),
        compiler_params=compiler(("parallel", "arbitrary", "arbitrary")),
    )(xp, wp)

    # B2: cheap elementwise normalize + affine + ReLU pass over y.
    kern2 = functools.partial(_bn_relu_kernel, eps=float(eps),
                              inv_n=1.0 / float(N))
    out = pl.pallas_call(
        kern2,
        out_shape=jax.ShapeDtypeStruct((Npad_b, Dpad), out_dtype),
        grid_spec=pltpu.PrefetchScalarGridSpec(
            num_scalar_prefetch=0,
            grid=(nm, nd),
            in_specs=[
                pl.BlockSpec((TM, TD), lambda m, d: (m, d)),         # y
                pl.BlockSpec((2, TD), lambda m, d: (0, d)),          # sums
                pl.BlockSpec((2, TD), lambda m, d: (0, d)),          # gamma/beta
            ],
            out_specs=pl.BlockSpec((TM, TD), lambda m, d: (m, d)),
        ),
        compiler_params=compiler(("parallel", "parallel")),
    )(y, stats, gbp)
    return out[:N, :Dout]


# ----------------------------------------------------------------------------
# Self-test
# ----------------------------------------------------------------------------
if __name__ == "__main__":
    def reference(x, w, b, gamma, beta, eps=1e-5):
        y = x @ w + b                                          # Linear (with bias)
        m = jnp.mean(y, axis=0, keepdims=True)
        v = jnp.mean((y - m) ** 2, axis=0, keepdims=True)      # biased variance
        return jnp.maximum((y - m) / jnp.sqrt(v + eps) * gamma + beta, 0.0)

    # Case 1: small module-default shapes -> fused batch-resident path (f32).
    N, Din, Dout = 8, 32, 16
    k1, k2, k3, k4, k5 = jax.random.split(jax.random.PRNGKey(0), 5)
    x = jax.random.normal(k1, (N, Din), dtype=jnp.float32)
    bound = 1.0 / (Din ** 0.5)
    w = jax.random.uniform(k2, (Din, Dout), minval=-bound, maxval=bound,
                           dtype=jnp.float32)
    b = jax.random.uniform(k3, (1, Dout), minval=-bound, maxval=bound,
                           dtype=jnp.float32)
    gamma = jax.random.uniform(k4, (1, Dout), minval=0.5, maxval=1.5,
                               dtype=jnp.float32)
    beta = jax.random.uniform(k5, (1, Dout), minval=-0.5, maxval=0.5,
                              dtype=jnp.float32)

    out = dense_forward(x, w, b, gamma, beta)
    jax.block_until_ready(out)
    ref = reference(x, w, b, gamma, beta)
    assert out.shape == (N, Dout)
    assert jnp.allclose(out, ref, atol=1e-4, rtol=1e-4), "fused path mismatch"

    # Case 2: batch-tiled path (VMEM footprint independent of N), f32.
    N2, Din2, Dout2 = 1000, 384, 320
    j1, j2, j3, j4, j5 = jax.random.split(jax.random.PRNGKey(1), 5)
    x2 = jax.random.normal(j1, (N2, Din2), dtype=jnp.float32)
    bound2 = 1.0 / (Din2 ** 0.5)
    w2 = jax.random.uniform(j2, (Din2, Dout2), minval=-bound2, maxval=bound2,
                            dtype=jnp.float32)
    b2 = jax.random.uniform(j3, (1, Dout2), minval=-bound2, maxval=bound2,
                            dtype=jnp.float32)
    gamma2 = jax.random.uniform(j4, (1, Dout2), minval=0.5, maxval=1.5,
                                dtype=jnp.float32)
    beta2 = jax.random.uniform(j5, (1, Dout2), minval=-0.5, maxval=0.5,
                               dtype=jnp.float32)

    out2 = dense_forward(x2, w2, b2, gamma2, beta2, force_batch_tiled=True)
    jax.block_until_ready(out2)
    ref2 = reference(x2, w2, b2, gamma2, beta2)
    assert out2.shape == (N2, Dout2)
    assert jnp.allclose(out2, ref2, atol=1e-3, rtol=1e-3), "batch-tiled mismatch"

    # Case 3: bf16-MXU fast path (v6e/v7x), f32 accumulation; loose tolerance.
    out3 = dense_forward(x, w, b, gamma, beta, mxu_dtype=jnp.bfloat16)
    jax.block_until_ready(out3)
    assert jnp.allclose(out3, ref, atol=1e-1, rtol=1e-1), "bf16 path mismatch"

    print("KERNEL_OK")
</pallas_src>

<mosaic_0001>
module attributes {stable_mosaic.version = 11 : i64} {
  func.func @_fused_dense_bn_relu_kernel(%arg0: i32, %arg1: i32, %arg2: memref<8x128xf32, #tpu.memory_space<vmem>>, %arg3: memref<128x128xf32, #tpu.memory_space<vmem>>, %arg4: memref<2x128xf32, #tpu.memory_space<vmem>>, %arg5: memref<8x128xf32, #tpu.memory_space<vmem>>) attributes {dimension_semantics = [#tpu.dimension_semantics<parallel>, #tpu.dimension_semantics<arbitrary>], iteration_bounds = array<i64: 1, 1>, scalar_prefetch = 0 : i64, scratch_operands = 0 : i64, tpu.core_type = #tpu.core_type<tc>, window_params = [{transform_indices = @transform_0, window_bounds = array<i64: 8, 128>}, {transform_indices = @transform_1, window_bounds = array<i64: 128, 128>}, {transform_indices = @transform_2, window_bounds = array<i64: 2, 128>}, {transform_indices = @transform_3, window_bounds = array<i64: 8, 128>}]} {
    %c0 = arith.constant 0 : index
    %c0_0 = arith.constant 0 : index
    %0 = vector.load %arg2[%c0, %c0_0] : memref<8x128xf32, #tpu.memory_space<vmem>>, vector<8x128xf32>
    %c0_1 = arith.constant 0 : index
    %c0_2 = arith.constant 0 : index
    %1 = vector.load %arg3[%c0_1, %c0_2] : memref<128x128xf32, #tpu.memory_space<vmem>>, vector<128x128xf32>
    %cst = arith.constant dense<0.000000e+00> : vector<8x128xf32>
    %2 = tpu.matmul %0, %1, %cst {dimension_numbers = #tpu.dot_dimension_numbers<[1], [0], [0], [1], [0, 0, 1, 1], [], []>} : vector<8x128xf32>, vector<128x128xf32>, vector<8x128xf32> -> vector<8x128xf32>
    %c0_i32 = arith.constant 0 : i32
    %3 = arith.cmpi eq, %arg1, %c0_i32 : i32
    %4 = arith.extui %3 : i1 to i32
    %c0_i32_3 = arith.constant 0 : i32
    %5 = arith.cmpi ne, %4, %c0_i32_3 : i32
    scf.if %5 {
      %c0_8 = arith.constant 0 : index
      %c0_9 = arith.constant 0 : index
      %12 = vector.load %arg5[%c0_8, %c0_9] : memref<8x128xf32, #tpu.memory_space<vmem>>, vector<8x128xf32>
      tpu.vector_store %arg5[%c0_8, %c0_9], %2 {strides = array<i32>} : memref<8x128xf32, #tpu.memory_space<vmem>>, vector<8x128xf32>,
    } else {
    }
    %c0_i32_4 = arith.constant 0 : i32
    %6 = arith.cmpi ne, %arg1, %c0_i32_4 : i32
    %7 = arith.extui %6 : i1 to i32
    %c0_i32_5 = arith.constant 0 : i32
    %8 = arith.cmpi ne, %7, %c0_i32_5 : i32
    scf.if %8 {
      %c0_8 = arith.constant 0 : index
      %c0_9 = arith.constant 0 : index
      %12 = vector.load %arg5[%c0_8, %c0_9] : memref<8x128xf32, #tpu.memory_space<vmem>>, vector<8x128xf32>
      %13 = arith.addf %12, %2 : vector<8x128xf32>
      %c0_10 = arith.constant 0 : index
      %c0_11 = arith.constant 0 : index
      %14 = vector.load %arg5[%c0_10, %c0_11] : memref<8x128xf32, #tpu.memory_space<vmem>>, vector<8x128xf32>
      tpu.vector_store %arg5[%c0_10, %c0_11], %13 {strides = array<i32>} : memref<8x128xf32, #tpu.memory_space<vmem>>, vector<8x128xf32>,
    } else {
    }
    %c0_i32_6 = arith.constant 0 : i32
    %9 = arith.cmpi eq, %arg1, %c0_i32_6 : i32
    %10 = arith.extui %9 : i1 to i32
    %c0_i32_7 = arith.constant 0 : i32
    %11 = arith.cmpi ne, %10, %c0_i32_7 : i32
    scf.if %11 {
      %c0_8 = arith.constant 0 : index
      %c0_9 = arith.constant 0 : index
      %12 = vector.load %arg5[%c0_8, %c0_9] : memref<8x128xf32, #tpu.memory_space<vmem>>, vector<8x128xf32>
      %cst_10 = arith.constant dense<0.000000e+00> : vector<128xf32>
      %13 = vector.multi_reduction <add>, %12, %cst_10 [0] : vector<8x128xf32> to vector<128xf32>
      %14 = vector.shape_cast %13 : vector<128xf32> to vector<1x128xf32>
      %15 = arith.mulf %12, %12 : vector<8x128xf32>
      %cst_11 = arith.constant dense<0.000000e+00> : vector<128xf32>
      %16 = vector.multi_reduction <add>, %15, %cst_11 [0] : vector<8x128xf32> to vector<128xf32>
      %17 = vector.shape_cast %16 : vector<128xf32> to vector<1x128xf32>
      %cst_12 = arith.constant 1.250000e-01 : f32
      %18 = vector.broadcast %cst_12 : f32 to vector<1x128xf32>
      %19 = arith.mulf %14, %18 : vector<1x128xf32>
      %cst_13 = arith.constant 1.250000e-01 : f32
      %20 = vector.broadcast %cst_13 : f32 to vector<1x128xf32>
      %21 = arith.mulf %17, %20 : vector<1x128xf32>
      %22 = arith.mulf %19, %19 : vector<1x128xf32>
      %23 = arith.subf %21, %22 : vector<1x128xf32>
      %cst_14 = arith.constant 0.000000e+00 : f32
      %24 = vector.broadcast %cst_14 : f32 to vector<1x128xf32>
      %25 = arith.maximumf %23, %24 : vector<1x128xf32>
      %c0_15 = arith.constant 0 : index
      %c0_16 = arith.constant 0 : index
      %26 = vector.load %arg4[%c0_15, %c0_16] : memref<2x128xf32, #tpu.memory_space<vmem>>, vector<2x128xf32>
      %27 = vector.extract_strided_slice %26 {offsets = [0, 0], sizes = [1, 128], strides = [1, 1]} : vector<2x128xf32> to vector<1x128xf32>
      %cst_17 = arith.constant 9.99999974E-6 : f32
      %28 = vector.broadcast %cst_17 : f32 to vector<1x128xf32>
      %29 = arith.addf %25, %28 : vector<1x128xf32>
      %30 = math.rsqrt %29 : vector<1x128xf32>
      %31 = arith.mulf %27, %30 : vector<1x128xf32>
      %32 = vector.extract_strided_slice %26 {offsets = [1, 0], sizes = [1, 128], strides = [1, 1]} : vector<2x128xf32> to vector<1x128xf32>
      %33 = arith.mulf %19, %31 : vector<1x128xf32>
      %34 = arith.subf %32, %33 : vector<1x128xf32>
      %35 = vector.broadcast %31 : vector<1x128xf32> to vector<8x128xf32>
      %36 = arith.mulf %12, %35 : vector<8x128xf32>
      %37 = vector.broadcast %34 : vector<1x128xf32> to vector<8x128xf32>
      %38 = arith.addf %36, %37 : vector<8x128xf32>
      %cst_18 = arith.constant 0.000000e+00 : f32
      %39 = vector.broadcast %cst_18 : f32 to vector<8x128xf32>
      %40 = arith.maximumf %38, %39 : vector<8x128xf32>
      %c0_19 = arith.constant 0 : index
      %c0_20 = arith.constant 0 : index
      %41 = vector.load %arg5[%c0_19, %c0_20] : memref<8x128xf32, #tpu.memory_space<vmem>>, vector<8x128xf32>
      tpu.vector_store %arg5[%c0_19, %c0_20], %40 {strides = array<i32>} : memref<8x128xf32, #tpu.memory_space<vmem>>, vector<8x128xf32>,
    } else {
    }
    return
  }
  func.func @transform_0(%arg0: i32, %arg1: i32) -> (i32, i32) {
    %c0_i32 = arith.constant 0 : i32
    %c0_i32_0 = arith.constant 0 : i32
    return %c0_i32, %arg1 : i32, i32
  }
  func.func @transform_1(%arg0: i32, %arg1: i32) -> (i32, i32) {
    %c0_i32 = arith.constant 0 : i32
    return %arg1, %arg0 : i32, i32
  }
  func.func @transform_2(%arg0: i32, %arg1: i32) -> (i32, i32) {
    %c0_i32 = arith.constant 0 : i32
    %c0_i32_0 = arith.constant 0 : i32
    return %c0_i32, %arg0 : i32, i32
  }
  func.func @transform_3(%arg0: i32, %arg1: i32) -> (i32, i32) {
    %c0_i32 = arith.constant 0 : i32
    %c0_i32_0 = arith.constant 0 : i32
    return %c0_i32, %arg0 : i32, i32
  }
}

</mosaic_0001>

<llo_original>
// kernel: tpu_custom_call.1
$region0: #{tpu_custom_call.1}
  #allocation0 [shape = 'u32[]', space=smem, size = 0x4, offset = 0x4, fixed_abs, tag = 'smem constant byte address 0x4 - core index']
  #allocation1 [shape = 'u32[144,128]{1,0:T(1,128)}', space=vmem, size = 0x12000, scoped, tag = 'internal scratch']
  %s0 = inlined_call_operand.hbm [shape: f32[8,128], index: 0, kind: input, shape index: {}]
  %s1 = inlined_call_operand.hbm [shape: f32[128,128], index: 1, kind: input, shape index: {}]
  %s2 = inlined_call_operand.vmem [shape: f32[2,128], index: 2, kind: input, shape index: {}]
  %s3 = inlined_call_operand.hbm [shape: f32[8,128], index: 3, kind: output, shape index: {}]
  %s4 = sld [smem:[#allocation0]]
  $region42: #{tpu_custom_call.1} parent=0
    _
  %s6 = ssub.s32 1, %s4
  %s7 = scalar_select 0, %s6, %s4
  $region1: #{tpu_custom_call.1} parent=0
    #allocation2 [shape = 'u8[4096]{0}', space=vmem, size = 0x1000, scoped, tag = 'input window, operand 0, single buffered']
    #allocation3 [shape = 's32[1]{0}', space=sflag, size = 0x4, scoped, tag = 'scoped memory for tpu_custom_call.1']
    #allocation4 [shape = 's32[1]{0}', space=sflag, size = 0x4, scoped, tag = 'scoped memory for tpu_custom_call.1']
    #allocation5 [shape = 'u8[65536]{0}', space=vmem, size = 0x10000, scoped, tag = 'input window, operand 1, single buffered']
    #allocation6 [shape = 's32[1]{0}', space=sflag, size = 0x4, scoped, tag = 'scoped memory for tpu_custom_call.1']
    #allocation7 [shape = 'u8[4096]{0}', space=vmem, size = 0x1000, scoped, tag = 'output window, operand 0, single buffered']
    %8 = vsyncpa [#allocation3], 0
    %9 = vsyncpa [#allocation6], 0
    %10 = vsyncpa [#allocation4], 0
    // Predicated region
    $region2: #{tpu_custom_call.1} parent=1 // pred_check
      _
    $region3: #{tpu_custom_call.1} parent=1 // pred_check_branch
      %12 = sbr.rel (0) target = $region5
    $region4: #{tpu_custom_call.1} parent=1 // pred_region
      %s14 = ssub.s32 128, 128
      %15 = vsyncadd [#allocation3], %s14
      %s17 = sshll.u32 [#allocation2], 4
      %s18 = int_to_ptr.vmem [resolvable:$true] %s17
      %20 = dma.hbm_to_vmem [thread:$0]  %s0, 128, %s18, [#allocation3]
    $region5: #{tpu_custom_call.1} parent=1 // pred_fallthru
      _
    // Predicated region
    $region6: #{tpu_custom_call.1} parent=1 // pred_check
      _
    $region7: #{tpu_custom_call.1} parent=1 // pred_check_branch
      %22 = sbr.rel (0) target = $region9
    $region8: #{tpu_custom_call.1} parent=1 // pred_region
      %s24 = ssub.s32 2048, 2048
      %25 = vsyncadd [#allocation6], %s24
      %s26 = sshll.u32 [#allocation5], 4
      %s27 = int_to_ptr.vmem [resolvable:$true] %s26
      %32 = dma.hbm_to_vmem [thread:$0]  %s1, 2048, %s27, [#allocation6], 128, 128, 8
    $region9: #{tpu_custom_call.1} parent=1 // pred_fallthru
      _
    // Predicated region
    $region10: #{tpu_custom_call.1} parent=1 // pred_check
      _
    $region11: #{tpu_custom_call.1} parent=1 // pred_check_branch
      %34 = sbr.rel (0) target = $region13
    $region12: #{tpu_custom_call.1} parent=1 // pred_region
      _
    $region13: #{tpu_custom_call.1} parent=1 // pred_fallthru
      _
    // Predicated region
    $region14: #{tpu_custom_call.1} parent=1 // pred_check
      _
    $region15: #{tpu_custom_call.1} parent=1 // pred_check_branch
      %36 = sbr.rel (0) target = $region17
    $region16: #{tpu_custom_call.1} parent=1 // pred_region
      %37 = dma.done [#allocation3], 128
    $region17: #{tpu_custom_call.1} parent=1 // pred_fallthru
      _
    // Predicated region
    $region18: #{tpu_custom_call.1} parent=1 // pred_check
      _
    $region19: #{tpu_custom_call.1} parent=1 // pred_check_branch
      %39 = sbr.rel (0) target = $region21
    $region20: #{tpu_custom_call.1} parent=1 // pred_region
      %40 = dma.done [#allocation6], 2048
    $region21: #{tpu_custom_call.1} parent=1 // pred_fallthru
      _
    %v41 = vld [vmem:[#allocation2] sm:$0xff]
    %v42 = vld [vmem:[#allocation5] sm:$0xff]
    %v43 = vld [vmem:[#allocation5 + $0x8] sm:$0xff]
    %v44 = vld [vmem:[#allocation5 + $0x10] sm:$0xff]
    %v45 = vld [vmem:[#allocation5 + $0x18] sm:$0xff]
    %v46 = vld [vmem:[#allocation5 + $0x20] sm:$0xff]
    %v47 = vld [vmem:[#allocation5 + $0x28] sm:$0xff]
    %v48 = vld [vmem:[#allocation5 + $0x30] sm:$0xff]
    %v49 = vld [vmem:[#allocation5 + $0x38] sm:$0xff]
    %v50 = vld [vmem:[#allocation5 + $0x40] sm:$0xff]
    %v51 = vld [vmem:[#allocation5 + $0x48] sm:$0xff]
    %v52 = vld [vmem:[#allocation5 + $0x50] sm:$0xff]
    %v53 = vld [vmem:[#allocation5 + $0x58] sm:$0xff]
    %v54 = vld [vmem:[#allocation5 + $0x60] sm:$0xff]
    %v55 = vld [vmem:[#allocation5 + $0x68] sm:$0xff]
    %v56 = vld [vmem:[#allocation5 + $0x70] sm:$0xff]
    %v57 = vld [vmem:[#allocation5 + $0x78] sm:$0xff]
    %58 = vmatprep.subr.mxu0 0.0
    %59 = vmatpush1.msra.mxu0 %v42
    %60 = vmatprep.subr.mxu0 0.0
    %61 = vmatpush1.msra.mxu0 %v43
    %62 = vmatprep.subr.mxu0 0.0
    %63 = vmatpush1.msra.mxu0 %v44
    %64 = vmatprep.subr.mxu0 0.0
    %65 = vmatpush1.msra.mxu0 %v45
    %66 = vmatprep.subr.mxu0 0.0
    %67 = vmatpush1.msra.mxu0 %v46
    %68 = vmatprep.subr.mxu0 0.0
    %69 = vmatpush1.msra.mxu0 %v47
    %70 = vmatprep.subr.mxu0 0.0
    %71 = vmatpush1.msra.mxu0 %v48
    %72 = vmatprep.subr.mxu0 0.0
    %73 = vmatpush1.msra.mxu0 %v49
    %74 = vmatprep.subr.mxu0 0.0
    %75 = vmatpush1.msra.mxu0 %v50
    %76 = vmatprep.subr.mxu0 0.0
    %77 = vmatpush1.msra.mxu0 %v51
    %78 = vmatprep.subr.mxu0 0.0
    %79 = vmatpush1.msra.mxu0 %v52
    %80 = vmatprep.subr.mxu0 0.0
    %81 = vmatpush1.msra.mxu0 %v53
    %82 = vmatprep.subr.mxu0 0.0
    %83 = vmatpush1.msra.mxu0 %v54
    %84 = vmatprep.subr.mxu0 0.0
    %85 = vmatpush1.msra.mxu0 %v55
    %86 = vmatprep.subr.mxu0 0.0
    %87 = vmatpush1.msra.mxu0 %v56
    %88 = vmatprep.subr.mxu0 0.0
    %89 = vmatpush1.msra.mxu0 %v57
    %90 = vmatprep.subr.mxu0 0.0
    %91 = vmatpush1.msra.mxu0 0.0
    %92 = vmatprep.subr.mxu0 0.0
    %93 = vmatpush1.msra.mxu0 0.0
    %94 = vmatprep.subr.mxu0 0.0
    %95 = vmatpush1.msra.mxu0 0.0
    %96 = vmatprep.subr.mxu0 0.0
    %97 = vmatpush1.msra.mxu0 0.0
    %98 = vmatprep.subr.mxu0 0.0
    %99 = vmatpush1.msra.mxu0 0.0
    %100 = vmatprep.subr.mxu0 0.0
    %101 = vmatpush1.msra.mxu0 0.0
    %102 = vmatprep.subr.mxu0 0.0
    %103 = vmatpush1.msra.mxu0 0.0
    %104 = vmatprep.subr.mxu0 0.0
    %105 = vmatpush1.msra.mxu0 0.0
    %106 = vmatprep.subr.mxu0 0.0
    %107 = vmatpush1.msra.mxu0 0.0
    %108 = vmatprep.subr.mxu0 0.0
    %109 = vmatpush1.msra.mxu0 0.0
    %110 = vmatprep.subr.mxu0 0.0
    %111 = vmatpush1.msra.mxu0 0.0
    %112 = vmatprep.subr.mxu0 0.0
    %113 = vmatpush1.msra.mxu0 0.0
    %114 = vmatprep.subr.mxu0 0.0
    %115 = vmatpush1.msra.mxu0 0.0
    %116 = vmatprep.subr.mxu0 0.0
    %117 = vmatpush1.msra.mxu0 0.0
    %118 = vmatprep.subr.mxu0 0.0
    %119 = vmatpush1.msra.mxu0 0.0
    %120 = vmatprep.subr.mxu0 0.0
    %121 = vmatpush1.msra.mxu0 0.0
    %122 = vmatprep.mubr.f32.mxu0 0.0
    %123 = vmatmul.mubr.f32.gmra.mrb[0].mxu0 %v41
    %v124 = vpop.f32.mrb[0].mxu0
    %v125 = vadd.f32 0.0, %v124
    %v126 = vpop.f32.mrb[0].mxu0
    %127 = vdwg.mxu0
    %p128 = scmp.eq.s32.totalorder 0, 0
    // Predicated region
    $region22: #{tpu_custom_call.1} parent=1 // pred_check
      %p129 = pneg %p128
    $region23: #{tpu_custom_call.1} parent=1 // pred_check_branch
      %131 = sbr.rel (%p129) target = $region25
    $region24: #{tpu_custom_call.1} parent=1 // pred_region
      %132 = vst [vmem:[#allocation7] sm:$0xff] %v125
    $region25: #{tpu_custom_call.1} parent=1 // pred_fallthru
      _
    %p133 = scmp.ne.s32.totalorder 0, 0
    // Predicated region
    $region26: #{tpu_custom_call.1} parent=1 // pred_check
      %p134 = pneg %p133
    $region27: #{tpu_custom_call.1} parent=1 // pred_check_branch
      %136 = sbr.rel (%p134) target = $region29
    $region28: #{tpu_custom_call.1} parent=1 // pred_region
      %v137 = vld [vmem:[#allocation7] sm:$0xff]
      %v138 = vadd.f32 %v137, %v125
      %139 = vst [vmem:[#allocation7] sm:$0xff] %v138
    $region29: #{tpu_custom_call.1} parent=1 // pred_fallthru
      _
    // Predicated region
    $region30: #{tpu_custom_call.1} parent=1 // pred_check
      %p140 = pneg %p128
    $region31: #{tpu_custom_call.1} parent=1 // pred_check_branch
      %142 = sbr.rel (%p140) target = $region33
    $region32: #{tpu_custom_call.1} parent=1 // pred_region
      %v143 = vld [vmem:[#allocation7] sm:$0xff]
      %v144 = vrot.slane %v143, 4
      %v145 = vadd.f32 %v143, %v144
      %v146 = vrot.slane %v145, 2
      %v147 = vadd.f32 %v145, %v146
      %v148 = vrot.slane %v147, 1
      %v149 = vadd.f32 %v147, %v148
      %v150 = vmul.f32 %v143, %v143
      %v151 = vrot.slane %v150, 4
      %v152 = vadd.f32 %v150, %v151
      %v153 = vrot.slane %v152, 2
      %v154 = vadd.f32 %v152, %v153
      %v155 = vrot.slane %v154, 1
      %v156 = vadd.f32 %v154, %v155
      %v157 = vmul.f32 %v149, 0.125
      %v158 = vmul.f32 %v156, 0.125
      %v159 = vmul.f32 %v157, %v157
      %v160 = vsub.f32 %v158, %v159
      %v161 = vmax.f32 %v160, 0.0
      %v162 = vld [vmem:[%s2] sm:$0x3]
      %v163 = vadd.f32 %v161, 1e-05
      %v164 = vrsqrt.pop %v163
      %v165 = vmul.f32 %v162, %v164
      %v166 = vmul.f32 %v157, %v165
      %v168 = vrot.slane %v166, 7
      %v170 = vsub.f32 %v162, %v168
      %v171 = vlaneseq
      %v172 = vshrl.u32 %v171, 7
      %v173 = vsub.s32 0, %v172
      %v174 = vrot.slane %v165, %v173
      %v175 = vmul.f32 %v143, %v174
      %v176 = vlaneseq
      %v177 = vshrl.u32 %v176, 7
      %v178 = vsub.s32 1, %v177
      %v179 = vrot.slane %v170, %v178
      %v180 = vadd.f32 %v175, %v179
      %v181 = vmax.f32 %v180, 0.0
      %182 = vst [vmem:[#allocation7] sm:$0xff] %v181
    $region33: #{tpu_custom_call.1} parent=1 // pred_fallthru
      _
    // Predicated region
    $region34: #{tpu_custom_call.1} parent=1 // pred_check
      _
    $region35: #{tpu_custom_call.1} parent=1 // pred_check_branch
      %184 = sbr.rel (0) target = $region37
    $region36: #{tpu_custom_call.1} parent=1 // pred_region
      %s186 = ssub.s32 128, 128
      %187 = vsyncadd [#allocation4], %s186
      %s189 = sshll.u32 [#allocation7], 4
      %s190 = int_to_ptr.vmem [resolvable:$true] %s189
      %192 = dma.vmem_to_hbm [thread:$0]  %s190, 128, %s3, [#allocation4]
    $region37: #{tpu_custom_call.1} parent=1 // pred_fallthru
      _
    // Predicated region
    $region38: #{tpu_custom_call.1} parent=1 // pred_check
      _
    $region39: #{tpu_custom_call.1} parent=1 // pred_check_branch
      %194 = sbr.rel (0) target = $region41
    $region40: #{tpu_custom_call.1} parent=1 // pred_region
      %195 = dma.done [#allocation4], 128
    $region41: #{tpu_custom_call.1} parent=1 // pred_fallthru
      _
    %196 = vsyncpa [#allocation3], 1
    %197 = vsyncpa [#allocation6], 1
    %198 = vsyncpa [#allocation4], 1

</llo_original>
